<compile_context>
chip_gen: v7x
topology: tpu7x:2x2x1
jax: 0.10.0
libtpu: 0.0.40
codegen_flags: <defaults>
</compile_context>

<pallas_src>
import jax
import jax.numpy as jnp
from jax.experimental import pallas as pl
from jax.experimental.pallas import tpu as pltpu


def apply_noise_kernel(w_ref, x_ref, noise_ref, o_ref):
    # w_ref:     (TC, 1)   per-channel scale for this channel tile
    # x_ref:     (TC, TS)  one batch element, one channel tile, one spatial tile
    # noise_ref: (1,  TS)  shared across channels (broadcast along sublanes)
    # o_ref:     (TC, TS)
    o_ref[...] = x_ref[...] + w_ref[...] * noise_ref[...]


def _pick_tile(extent, align, max_tile):
    """Largest `align`-aligned tile <= max_tile that evenly divides `extent`.

    Falls back to the full extent (untiled) if no aligned divisor exists or the
    extent is already small enough.
    """
    if extent <= max_tile:
        return extent
    start = max_tile - (max_tile % align)
    for t in range(start, align - 1, -align):
        if extent % t == 0:
            return t
    return extent


def apply_noise(x, weight, noise=None, *, key=None):
    """x: (N, C, H, W); weight: (C,); noise: (N, 1, H, W) or None."""
    n, c, h, w = x.shape
    if noise is None:
        # TODO(synk): could generate noise in-kernel with pltpu.stateful_normal to
        # skip the extra HBM array; kept host-side so the path is reproducible.
        if key is None:
            raise ValueError("key is required when noise is None")
        noise = jax.random.normal(key, (n, 1, h, w), dtype=x.dtype)

    s = h * w
    x2 = x.reshape(n, c, s)
    noise2 = noise.reshape(n, 1, s).astype(x.dtype)
    w2 = weight.reshape(c, 1).astype(x.dtype)   # param-setup glue: (C,) -> (C, 1)

    # Tile sizes chosen so the double-buffered working set
    #   2 * (2*tc*ts + ts + tc) * itemsize
    # stays a few MiB (safe under every chip's scoped-VMEM default) while keeping
    # per-step DMAs large (>= 0.5 MiB) so the ~0.35 us grid-step overhead is hidden.
    tc = _pick_tile(c, 8, 128)      # sublane axis: multiple of 8 (or full C)
    ts = _pick_tile(s, 128, 4096)   # lane axis:    multiple of 128 (or full S)
    grid = (n, c // tc, s // ts)

    itemsize = jnp.dtype(x.dtype).itemsize
    flops = 2 * n * c * s                       # one mul + one add per element
    bytes_accessed = (x2.size + noise2.size + w2.size + n * c * s) * itemsize

    out = pl.pallas_call(
        apply_noise_kernel,
        out_shape=jax.ShapeDtypeStruct((n, c, s), x.dtype),
        grid=grid,
        in_specs=[
            # weight: indexed only by the channel-tile axis -> tiny, mostly-resident DMA
            pl.BlockSpec((tc, 1), lambda i, jc, js: (jc, 0)),
            # x / noise: tiled on (batch, channel, spatial); batch dim squeezed in-kernel
            pl.BlockSpec((None, tc, ts), lambda i, jc, js: (i, jc, js)),
            pl.BlockSpec((None, 1, ts), lambda i, jc, js: (i, 0, js)),
        ],
        out_specs=pl.BlockSpec((None, tc, ts), lambda i, jc, js: (i, jc, js)),
        compiler_params=pltpu.CompilerParams(
            dimension_semantics=("parallel", "parallel", "parallel")),
        cost_estimate=pl.CostEstimate(
            flops=flops, transcendentals=0, bytes_accessed=bytes_accessed),
    )(w2, x2, noise2)

    return out.reshape(n, c, h, w)


def reference(x, weight, noise):
    """Pure-JAX reference matching the PyTorch forward."""
    return x + weight.reshape(1, -1, 1, 1) * noise


if __name__ == "__main__":
    # Small shapes consistent with the module: batch=2, channels=4, spatial=16.
    N, C, H, W = 2, 4, 16, 16

    key = jax.random.PRNGKey(0)
    kx, kn, kw = jax.random.split(key, 3)
    x = jax.random.normal(kx, (N, C, H, W), dtype=jnp.float32)
    noise = jax.random.normal(kn, (N, 1, H, W), dtype=jnp.float32)
    # nn.Parameter(torch.zeros(channels)) would make the op an identity;
    # use a random weight so the test exercises the scale+add path.
    weight = jax.random.normal(kw, (C,), dtype=jnp.float32)

    out = jax.block_until_ready(apply_noise(x, weight, noise))
    ref = reference(x, weight, noise)
    assert out.shape == (N, C, H, W)
    assert jnp.allclose(out, ref, atol=1e-6, rtol=1e-6), "mismatch vs reference"

    # noise=None path (noise generated host-side with a fixed key -> reproducible).
    out2 = jax.block_until_ready(apply_noise(x, weight, None, key=kn))
    assert jnp.allclose(out2, ref, atol=1e-6, rtol=1e-6), "noise=None path mismatch"

    # A slightly larger case that exercises the spatial-tiling path (S = 16384 -> 4 tiles).
    N2, C2, H2, W2 = 1, 8, 128, 128
    k2 = jax.random.split(key, 6)
    x_b = jax.random.normal(k2[3], (N2, C2, H2, W2), dtype=jnp.float32)
    n_b = jax.random.normal(k2[4], (N2, 1, H2, W2), dtype=jnp.float32)
    w_b = jax.random.normal(k2[5], (C2,), dtype=jnp.float32)
    out_b = jax.block_until_ready(apply_noise(x_b, w_b, n_b))
    assert jnp.allclose(out_b, reference(x_b, w_b, n_b), atol=1e-6, rtol=1e-6), \
        "tiled-path mismatch vs reference"

    print("KERNEL_OK")
</pallas_src>

<mosaic_0001>
module attributes {stable_mosaic.version = 11 : i64} {
  func.func @apply_noise_kernel(%arg0: i32, %arg1: i32, %arg2: i32, %arg3: memref<4x1xf32, #tpu.memory_space<vmem>>, %arg4: memref<1x4x256xf32, #tpu.memory_space<vmem>>, %arg5: memref<1x1x256xf32, #tpu.memory_space<vmem>>, %arg6: memref<1x4x256xf32, #tpu.memory_space<vmem>>) attributes {dimension_semantics = [#tpu.dimension_semantics<parallel>, #tpu.dimension_semantics<parallel>, #tpu.dimension_semantics<parallel>], iteration_bounds = array<i64: 2, 1, 1>, scalar_prefetch = 0 : i64, scratch_operands = 0 : i64, tpu.core_type = #tpu.core_type<tc>, window_params = [{transform_indices = @transform_0, window_bounds = array<i64: 4, 1>}, {transform_indices = @transform_1, window_bounds = array<i64: 1, 4, 256>}, {transform_indices = @transform_2, window_bounds = array<i64: 1, 1, 256>}, {transform_indices = @transform_3, window_bounds = array<i64: 1, 4, 256>}]} {
    %c0 = arith.constant 0 : index
    %c0_0 = arith.constant 0 : index
    %c0_1 = arith.constant 0 : index
    %0 = vector.load %arg4[%c0, %c0_0, %c0_1] : memref<1x4x256xf32, #tpu.memory_space<vmem>>, vector<1x4x256xf32>
    %1 = vector.shape_cast %0 : vector<1x4x256xf32> to vector<4x256xf32>
    %c0_2 = arith.constant 0 : index
    %c0_3 = arith.constant 0 : index
    %2 = vector.load %arg3[%c0_2, %c0_3] : memref<4x1xf32, #tpu.memory_space<vmem>>, vector<4x1xf32>
    %c0_4 = arith.constant 0 : index
    %c0_5 = arith.constant 0 : index
    %c0_6 = arith.constant 0 : index
    %3 = vector.load %arg5[%c0_4, %c0_5, %c0_6] : memref<1x1x256xf32, #tpu.memory_space<vmem>>, vector<1x1x256xf32>
    %4 = vector.shape_cast %3 : vector<1x1x256xf32> to vector<1x256xf32>
    %5 = vector.broadcast %2 : vector<4x1xf32> to vector<4x256xf32>
    %6 = vector.broadcast %4 : vector<1x256xf32> to vector<4x256xf32>
    %7 = arith.mulf %5, %6 : vector<4x256xf32>
    %8 = arith.addf %1, %7 : vector<4x256xf32>
    %c0_7 = arith.constant 0 : index
    %c0_8 = arith.constant 0 : index
    %c0_9 = arith.constant 0 : index
    %9 = vector.load %arg6[%c0_7, %c0_8, %c0_9] : memref<1x4x256xf32, #tpu.memory_space<vmem>>, vector<1x4x256xf32>
    %10 = vector.shape_cast %9 : vector<1x4x256xf32> to vector<4x256xf32>
    %11 = vector.shape_cast %8 : vector<4x256xf32> to vector<1x4x256xf32>
    tpu.vector_store %arg6[%c0_7, %c0_8, %c0_9], %11 {strides = array<i32>} : memref<1x4x256xf32, #tpu.memory_space<vmem>>, vector<1x4x256xf32>,
    return
  }
  func.func @transform_0(%arg0: i32, %arg1: i32, %arg2: i32) -> (i32, i32) {
    %c0_i32 = arith.constant 0 : i32
    %c0_i32_0 = arith.constant 0 : i32
    return %arg1, %c0_i32 : i32, i32
  }
  func.func @transform_1(%arg0: i32, %arg1: i32, %arg2: i32) -> (i32, i32, i32) {
    %c0_i32 = arith.constant 0 : i32
    return %arg0, %arg1, %arg2 : i32, i32, i32
  }
  func.func @transform_2(%arg0: i32, %arg1: i32, %arg2: i32) -> (i32, i32, i32) {
    %c0_i32 = arith.constant 0 : i32
    %c0_i32_0 = arith.constant 0 : i32
    return %arg0, %c0_i32, %arg2 : i32, i32, i32
  }
  func.func @transform_3(%arg0: i32, %arg1: i32, %arg2: i32) -> (i32, i32, i32) {
    %c0_i32 = arith.constant 0 : i32
    return %arg0, %arg1, %arg2 : i32, i32, i32
  }
}

</mosaic_0001>

<llo_original>
// kernel: tpu_custom_call.1
$region0: #{tpu_custom_call.1}
  #allocation0 [shape = 'u32[]', space=smem, size = 0x4, offset = 0x4, fixed_abs, tag = 'smem constant byte address 0x4 - core index']
  #allocation1 [shape = 'u32[144,128]{1,0:T(1,128)}', space=vmem, size = 0x12000, scoped, tag = 'internal scratch']
  %s0 = inlined_call_operand.vmem [shape: f32[4,1], index: 0, kind: input, shape index: {}]
  %s1 = inlined_call_operand.hbm [shape: f32[2,4,256], index: 1, kind: input, shape index: {}]
  %s2 = inlined_call_operand.vmem [shape: f32[2,1,256], index: 2, kind: input, shape index: {}]
  %s3 = inlined_call_operand.hbm [shape: f32[2,4,256], index: 3, kind: output, shape index: {}]
  %s4 = sld [smem:[#allocation0]]
  $region49: #{tpu_custom_call.1} parent=0
    _
  %s6 = ssub.s32 1, %s4
  %s7 = scalar_select 0, %s6, %s4
  $region1: #{tpu_custom_call.1} parent=0
    #allocation2 [shape = 'u8[8192]{0}', space=vmem, size = 0x2000, scoped, tag = 'input window, operand 1']
    #allocation3 [shape = 's32[2]{0}', space=sflag, size = 0x8, scoped, tag = 'scoped memory for tpu_custom_call.1']
    #allocation4 [shape = 's32[2]{0}', space=sflag, size = 0x8, scoped, tag = 'scoped memory for tpu_custom_call.1']
    #allocation5 [shape = 'u8[8192]{0}', space=vmem, size = 0x2000, scoped, tag = 'output window, operand 0']
    %8 = vsyncpa [#allocation3], 0
    %s9 = scalar_lea.sflag [#allocation3], 1
    %10 = vsyncpa %s9, 0
    %11 = vsyncpa [#allocation4], 0
    %s12 = scalar_lea.sflag [#allocation4], 1
    %13 = vsyncpa %s12, 0
    loop: start=0, step=1, limit=4
    $region2: #{tpu_custom_call.1} parent=1 // loop_pre_header
      _
    $region3: #{tpu_custom_call.1} parent=1 // loop_header
      %s15 = sphi 0, %s19
      %p16 = scmp.ge.s32.totalorder %s15, 4
      %s22 = sphi 0, %s41
      %s23 = sphi 0, %s37
      %s24 = sphi 0, %s33
      %s25 = sphi 0, %s22
      %s26 = sphi 0, %s23
      %s27 = sphi 0, %s24
      %s28 = sphi 0, %s25
      %s29 = sphi 0, %s26
      %s30 = sphi 0, %s27
      %s44 = sphi 0, %s46
      %s47 = sphi 0, %s44
      %s48 = sphi 0, %s47
      %s64 = sphi 0, %s48
      %s74 = sphi 0, %s76
      %s77 = sphi 0, %s74
      %s78 = sphi 0, %s77
      %s94 = sphi 0, %s78
      %s102 = sphi 0, %s104
      %s105 = sphi 0, %s102
      %s106 = sphi 0, %s105
      %s122 = sphi 0, %s106
      %s132 = sphi 0, %s134
      %s135 = sphi 0, %s132
      %s136 = sphi 0, %s135
      %s152 = sphi 0, %s136
    $region4: #{tpu_custom_call.1} parent=1 // loop_header_branch
      %18 = sbr.rel (%p16) target = $region8
    $region5: #{tpu_custom_call.1} parent=1 // loop_body
      %s20 = ssub.s32 %s15, 1
      %s21 = ssub.s32 %s15, 2
      %s31 = sadd.s32 1, %s24
      %p32 = scmp.ge.s32.totalorder %s31, 1
      %s33 = scalar_select %p32, 0, %s31
      %s34 = sadd.s32 1, %s23
      %s35 = scalar_select %p32, %s34, %s23
      %p36 = scmp.ge.s32.totalorder %s35, 1
      %s37 = scalar_select %p36, 0, %s35
      %s38 = sadd.s32 1, %s22
      %s39 = scalar_select %p36, %s38, %s22
      %p40 = scmp.ge.s32.totalorder %s39, 2
      %s41 = scalar_select %p40, 0, %s39
      %s42 = ssub.s32 %s23, %s37
      %p43 = scmp.eq.s32.totalorder %s42, 0
      %s45 = sadd.s32 %s44, 1
      %s46 = scalar_select %p43, %s44, %s45
      %p49 = pneg %p43
      %p50 = scmp.eq.s32.totalorder %s15, 1
      %p51 = por %p49, %p50
      %p52 = scmp.ne.s32.totalorder %s44, %s47
      %p53 = scmp.eq.s32.totalorder %s15, 0
      %p54 = por %p52, %p53
      %p55 = scmp.ne.s32.totalorder %s44, %s47
      %p56 = scmp.eq.s32.totalorder %s20, 1
      %p57 = por %p55, %p56
      %p58 = scmp.ne.s32.totalorder %s47, %s48
      %p59 = scmp.eq.s32.totalorder %s20, 0
      %p60 = por %p58, %p59
      %p61 = scmp.ne.s32.totalorder %s47, %s48
      %p62 = scmp.eq.s32.totalorder %s21, 1
      %p63 = por %p61, %p62
      %p65 = scmp.ne.s32.totalorder %s48, %s64
      %p66 = scmp.eq.s32.totalorder %s21, 0
      %p67 = por %p65, %p66
      %s68 = ssub.s32 %s22, %s41
      %s69 = ssub.s32 %s23, %s37
      %s70 = sor.u32 %s68, %s69
      %s71 = ssub.s32 %s24, %s33
      %s72 = sor.u32 %s70, %s71
      %p73 = scmp.eq.s32.totalorder %s72, 0
      %s75 = sadd.s32 %s74, 1
      %s76 = scalar_select %p73, %s74, %s75
      %p79 = pneg %p73
      %p80 = scmp.eq.s32.totalorder %s15, 1
      %p81 = por %p79, %p80
      %p82 = scmp.ne.s32.totalorder %s74, %s77
      %p83 = scmp.eq.s32.totalorder %s15, 0
      %p84 = por %p82, %p83
      %p85 = scmp.ne.s32.totalorder %s74, %s77
      %p86 = scmp.eq.s32.totalorder %s20, 1
      %p87 = por %p85, %p86
      %p88 = scmp.ne.s32.totalorder %s77, %s78
      %p89 = scmp.eq.s32.totalorder %s20, 0
      %p90 = por %p88, %p89
      %p91 = scmp.ne.s32.totalorder %s77, %s78
      %p92 = scmp.eq.s32.totalorder %s21, 1
      %p93 = por %p91, %p92
      %p95 = scmp.ne.s32.totalorder %s78, %s94
      %p96 = scmp.eq.s32.totalorder %s21, 0
      %p97 = por %p95, %p96
      %s98 = ssub.s32 %s22, %s41
      %s99 = ssub.s32 %s24, %s33
      %s100 = sor.u32 %s98, %s99
      %p101 = scmp.eq.s32.totalorder %s100, 0
      %s103 = sadd.s32 %s102, 1
      %s104 = scalar_select %p101, %s102, %s103
      %p107 = pneg %p101
      %p108 = scmp.eq.s32.totalorder %s15, 1
      %p109 = por %p107, %p108
      %p110 = scmp.ne.s32.totalorder %s102, %s105
      %p111 = scmp.eq.s32.totalorder %s15, 0
      %p112 = por %p110, %p111
      %p113 = scmp.ne.s32.totalorder %s102, %s105
      %p114 = scmp.eq.s32.totalorder %s20, 1
      %p115 = por %p113, %p114
      %p116 = scmp.ne.s32.totalorder %s105, %s106
      %p117 = scmp.eq.s32.totalorder %s20, 0
      %p118 = por %p116, %p117
      %p119 = scmp.ne.s32.totalorder %s105, %s106
      %p120 = scmp.eq.s32.totalorder %s21, 1
      %p121 = por %p119, %p120
      %p123 = scmp.ne.s32.totalorder %s106, %s122
      %p124 = scmp.eq.s32.totalorder %s21, 0
      %p125 = por %p123, %p124
      %s126 = ssub.s32 %s22, %s41
      %s127 = ssub.s32 %s23, %s37
      %s128 = sor.u32 %s126, %s127
      %s129 = ssub.s32 %s24, %s33
      %s130 = sor.u32 %s128, %s129
      %p131 = scmp.eq.s32.totalorder %s130, 0
      %s133 = sadd.s32 %s132, 1
      %s134 = scalar_select %p131, %s132, %s133
      %p137 = pneg %p131
      %p138 = scmp.eq.s32.totalorder %s15, 1
      %p139 = por %p137, %p138
      %p140 = scmp.ne.s32.totalorder %s132, %s135
      %p141 = scmp.eq.s32.totalorder %s15, 0
      %p142 = por %p140, %p141
      %p143 = scmp.ne.s32.totalorder %s132, %s135
      %p144 = scmp.eq.s32.totalorder %s20, 1
      %p145 = por %p143, %p144
      %p146 = scmp.ne.s32.totalorder %s135, %s136
      %p147 = scmp.eq.s32.totalorder %s20, 0
      %p148 = por %p146, %p147
      %p149 = scmp.ne.s32.totalorder %s135, %s136
      %p150 = scmp.eq.s32.totalorder %s21, 1
      %p151 = por %p149, %p150
      %p153 = scmp.ne.s32.totalorder %s136, %s152
      %p154 = scmp.eq.s32.totalorder %s21, 0
      %p155 = por %p153, %p154
      %p156 = scmp.le.s32.totalorder 1, %s15
      %p157 = scmp.lt.s32.totalorder %s15, 3
      %p158 = pnand %p156, %p157
      %p159 = pneg %p158
      // Predicated region
      $region9: #{tpu_custom_call.1} parent=5 // pred_check
        _
      $region10: #{tpu_custom_call.1} parent=5 // pred_check_branch
        %161 = sbr.rel (%p158) target = $region12
      $region11: #{tpu_custom_call.1} parent=5 // pred_region
        %s162 = ssub.s32 %s15, 1
        // Predicated region
        $region13: #{tpu_custom_call.1} parent=11 // pred_check
          %p163 = pneg %p60
        $region14: #{tpu_custom_call.1} parent=11 // pred_check_branch
          %165 = sbr.rel (%p163) target = $region16
        $region15: #{tpu_custom_call.1} parent=11 // pred_region
          %p166 = scmp.lt.s32.totalorder %s26, 0
          %s167 = scalar_select %p166, %s26, 0
          %s168 = smul.addr %s167, 4
          %s169 = scalar_lea.vmem %s0, %s168
        $region16: #{tpu_custom_call.1} parent=11 // pred_fallthru
          _
      $region12: #{tpu_custom_call.1} parent=5 // pred_fallthru
        _
      %p170 = scmp.lt.s32.totalorder %s15, 2
      // Predicated region
      $region17: #{tpu_custom_call.1} parent=5 // pred_check
        %p171 = pneg %p170
      $region18: #{tpu_custom_call.1} parent=5 // pred_check_branch
        %173 = sbr.rel (%p171) target = $region20
      $region19: #{tpu_custom_call.1} parent=5 // pred_region
        // Predicated region
        $region21: #{tpu_custom_call.1} parent=19 // pred_check
          %p174 = pneg %p84
        $region22: #{tpu_custom_call.1} parent=19 // pred_check_branch
          %176 = sbr.rel (%p174) target = $region24
        $region23: #{tpu_custom_call.1} parent=19 // pred_region
          %s177 = sand.u32 %s74, 1
          %s178 = scalar_lea.sflag [#allocation3], %s177
          %s179 = sand.u32 %s74, 1
          %s180 = smul.addr %s179, 8
          %s181 = scalar_lea.vmem [#allocation2], %s180
          %s182 = smul.u32 2, %s24
          %s184 = ssub.s32 128, 128
          %185 = vsyncadd %s178, %s184
          %s186 = smul.addr %s23, 2
          %s187 = sadd.s32 %s182, %s186
          %s188 = smul.addr %s22, 2
          %s189 = sadd.s32 %s187, %s188
          %s190 = smul.addr %s189, 64
          %s191 = scalar_lea.hbm %s1, %s190
          %s193 = sshll.u32 %s181, 4
          %s194 = int_to_ptr.vmem [resolvable:$true] %s193
          %196 = dma.hbm_to_vmem [thread:$0]  %s191, 128, %s194, %s178
        $region24: #{tpu_custom_call.1} parent=19 // pred_fallthru
          _
        // Predicated region
        $region25: #{tpu_custom_call.1} parent=19 // pred_check
          %p197 = pneg %p112
        $region26: #{tpu_custom_call.1} parent=19 // pred_check_branch
          %199 = sbr.rel (%p197) target = $region28
        $region27: #{tpu_custom_call.1} parent=19 // pred_region
          %s200 = smul.u32 2, %s24
          %p201 = scmp.lt.s32.totalorder %s22, 1
          %s202 = scalar_select %p201, %s22, 1
          %p203 = scmp.lt.s32.totalorder %s200, 1
          %s204 = scalar_select %p203, %s200, 1
          %s205 = smul.addr %s202, 2
          %s206 = sadd.s32 %s204, %s205
          %s207 = scalar_lea.vmem %s2, %s206
          %s208 = smul.u32 2, %s24
        $region28: #{tpu_custom_call.1} parent=19 // pred_fallthru
          _
      $region20: #{tpu_custom_call.1} parent=5 // pred_fallthru
        _
      %p209 = scmp.le.s32.totalorder 1, %s15
      %p210 = scmp.lt.s32.totalorder %s15, 3
      %p211 = pnand %p209, %p210
      %p212 = pneg %p211
      // Predicated region
      $region29: #{tpu_custom_call.1} parent=5 // pred_check
        _
      $region30: #{tpu_custom_call.1} parent=5 // pred_check_branch
        %214 = sbr.rel (%p211) target = $region32
      $region31: #{tpu_custom_call.1} parent=5 // pred_region
        %s215 = ssub.s32 %s15, 1
        %s216 = sand.u32 %s77, 1
        %s217 = scalar_lea.sflag [#allocation3], %s216
        %s218 = sand.u32 %s77, 1
        %s219 = smul.addr %s218, 8
        %s220 = scalar_lea.vmem [#allocation2], %s219
        // Predicated region
        $region33: #{tpu_custom_call.1} parent=31 // pred_check
          %p221 = pneg %p90
        $region34: #{tpu_custom_call.1} parent=31 // pred_check_branch
          %223 = sbr.rel (%p221) target = $region36
        $region35: #{tpu_custom_call.1} parent=31 // pred_region
          %224 = dma.done %s217, 128
        $region36: #{tpu_custom_call.1} parent=31 // pred_fallthru
          _
        %p225 = scmp.lt.s32.totalorder %s26, 0
        %s226 = scalar_select %p225, %s26, 0
        %s227 = smul.addr %s226, 4
        %s228 = scalar_lea.vmem %s0, %s227
        %p229 = pneg %p60
        %p230 = pneg %p57
        %s231 = sand.u32 %s77, 1
        %s232 = scalar_lea.sflag [#allocation3], %s231
        %s233 = sand.u32 %s77, 1
        %s234 = smul.addr %s233, 8
        %s235 = scalar_lea.vmem [#allocation2], %s234
        %p236 = pneg %p90
        %p237 = pneg %p87
        %s238 = smul.u32 2, %s27
        %p239 = scmp.lt.s32.totalorder %s25, 1
        %s240 = scalar_select %p239, %s25, 1
        %p241 = scmp.lt.s32.totalorder %s238, 1
        %s242 = scalar_select %p241, %s238, 1
        %s243 = smul.addr %s240, 2
        %s244 = sadd.s32 %s242, %s243
        %s245 = scalar_lea.vmem %s2, %s244
        %p246 = pneg %p118
        %p247 = pneg %p115
        %p248 = pneg %p148
        %p249 = pneg %p145
        %s250 = sand.u32 %s135, 1
        %s251 = scalar_lea.sflag [#allocation4], %s250
        %s252 = sand.u32 %s135, 1
        %s253 = smul.addr %s252, 8
        %s254 = scalar_lea.vmem [#allocation5], %s253
        %p255 = scmp.lt.s32.totalorder %s26, 0
        %s256 = scalar_select %p255, %s26, 0
        %s257 = smul.addr %s256, 4
        %s258 = scalar_lea.vmem %s0, %s257
        %s259 = smul.u32 2, %s27
        %s260 = smul.u32 2, %s27
        %p261 = scmp.lt.s32.totalorder %s25, 1
        %s262 = scalar_select %p261, %s25, 1
        %p263 = scmp.lt.s32.totalorder %s260, 1
        %s264 = scalar_select %p263, %s260, 1
        %s265 = smul.addr %s262, 2
        %s266 = sadd.s32 %s264, %s265
        %s267 = scalar_lea.vmem %s2, %s266
        %s268 = smul.u32 2, %s27
        %s269 = smul.u32 2, %s27
        %v270 = vld [vmem:[%s220] sm:$0xff]
        %v271 = vld [vmem:[%s258] sm:$0xf]
        %v272 = vld [vmem:[%s267] sm:$0x3]
        %274 = vset.pattern.permute.xlu0 0
        %275 = vperm.xlu0 %274, %v271
        %v276 = vpop.permute.xlu0 %275
        %v279 = vlaneseq
        %v280 = vshrl.u32 %v279, 7
        %v281 = vsub.s32 0, %v280
        %v282 = vrot.slane %v272, %v281
        %v283 = vlaneseq
        %v284 = vshrl.u32 %v283, 7
        %v285 = vsub.s32 1, %v284
        %v286 = vrot.slane %v272, %v285
        %v289 = vmul.f32 %v276, %v282
        %v290 = vmul.f32 %v276, %v286
        %v293 = vcombine.low %v289, %v290
        %v295 = vadd.f32 %v270, %v293
        %296 = vst [vmem:[%s254] sm:$0xff] %v295
        %s297 = sand.u32 %s135, 1
        %s298 = scalar_lea.sflag [#allocation4], %s297
        %s299 = sand.u32 %s135, 1
        %s300 = smul.addr %s299, 8
        %s301 = scalar_lea.vmem [#allocation5], %s300
        // Predicated region
        $region37: #{tpu_custom_call.1} parent=31 // pred_check
          %p302 = pneg %p145
        $region38: #{tpu_custom_call.1} parent=31 // pred_check_branch
          %304 = sbr.rel (%p302) target = $region40
        $region39: #{tpu_custom_call.1} parent=31 // pred_region
          %s305 = smul.u32 2, %s27
          %s307 = ssub.s32 128, 128
          %308 = vsyncadd %s298, %s307
          %s309 = smul.addr %s26, 2
          %s310 = sadd.s32 %s305, %s309
          %s311 = smul.addr %s25, 2
          %s312 = sadd.s32 %s310, %s311
          %s313 = smul.addr %s312, 64
          %s314 = scalar_lea.hbm %s3, %s313
          %s316 = sshll.u32 %s301, 4
          %s317 = int_to_ptr.vmem [resolvable:$true] %s316
          %319 = dma.vmem_to_hbm [thread:$0]  %s317, 128, %s314, %s298
        $region40: #{tpu_custom_call.1} parent=31 // pred_fallthru
          _
      $region32: #{tpu_custom_call.1} parent=5 // pred_fallthru
        _
      %p320 = scmp.le.s32.totalorder 2, %s15
      // Predicated region
      $region41: #{tpu_custom_call.1} parent=5 // pred_check
        %p321 = pneg %p320
      $region42: #{tpu_custom_call.1} parent=5 // pred_check_branch
        %323 = sbr.rel (%p321) target = $region44
      $region43: #{tpu_custom_call.1} parent=5 // pred_region
        %s324 = ssub.s32 %s15, 2
        // Predicated region
        $region45: #{tpu_custom_call.1} parent=43 // pred_check
          %p325 = pneg %p151
        $region46: #{tpu_custom_call.1} parent=43 // pred_check_branch
          %327 = sbr.rel (%p325) target = $region48
        $region47: #{tpu_custom_call.1} parent=43 // pred_region
          %s328 = sand.u32 %s136, 1
          %s329 = scalar_lea.sflag [#allocation4], %s328
          %s330 = sand.u32 %s136, 1
          %s331 = smul.addr %s330, 8
          %s332 = scalar_lea.vmem [#allocation5], %s331
          %333 = dma.done %s329, 128
        $region48: #{tpu_custom_call.1} parent=43 // pred_fallthru
          _
      $region44: #{tpu_custom_call.1} parent=5 // pred_fallthru
        _
    $region6: #{tpu_custom_call.1} parent=1 // loop_footer
      %s19 = sadd.s32 1, %s15
    $region7: #{tpu_custom_call.1} parent=1 // loop_footer_branch
      %14 = sbr.rel target = $region3
    $region8: #{tpu_custom_call.1} parent=1 // loop_exit
      _
    %334 = vsyncpa [#allocation3], 1
    %s335 = scalar_lea.sflag [#allocation3], 1
    %336 = vsyncpa %s335, 1
    %337 = vsyncpa [#allocation4], 1
    %s338 = scalar_lea.sflag [#allocation4], 1
    %339 = vsyncpa %s338, 1

</llo_original>
